<compile_context>
chip_gen: v7x
topology: tpu7x:2x2x1
jax: 0.10.0
libtpu: 0.0.40
codegen_flags: <defaults>
</compile_context>

<pallas_src>
import functools

import jax
import jax.numpy as jnp
from jax.experimental import pallas as pl
from jax.experimental.pallas import tpu as pltpu


def _round_up(x, m):
    return ((x + m - 1) // m) * m


def _class_pad_target(c):
    """Smallest power of two >= c (divides 128).  Caller guarantees c <= 128."""
    p = 1
    while p < c:
        p *= 2
    return p


def _distance_loss_kernel(logits_ref, dist_ref, out_ref, *,
                          cp, d1, d2, dt, nr, tbr, ragged):
    f32 = jnp.float32
    bf16 = jnp.bfloat16

    # ---- label embeddings, computed directly on the interleaved (t, c, t, c, ...) layout ----
    d = dist_ref[...].astype(f32)                                      # (TBR, 256)
    # temporal: d==1 -> 1 ; d<1 -> d*dt (covers d==0 -> 0 exactly) ; else d
    lbl_t = jnp.where(d == 1.0, 1.0, jnp.where(d < 1.0, d * dt, d))
    # categorical: 0->1, 1->d1, 2->d2, 3->0, else d
    lbl_c = jnp.where(d == 0.0, 1.0,
                      jnp.where(d == 1.0, d1,
                                jnp.where(d == 2.0, d2,
                                          jnp.where(d == 3.0, 0.0, d))))
    lane = jax.lax.broadcasted_iota(jnp.int32, d.shape, 1)
    lbl = jnp.where((lane & 1) == 0, lbl_t, lbl_c)                     # (TBR, 256)

    # ---- pair compaction on the idle MXU: lblsum[k, q] = lbl[k, 2q] + lbl[k, 2q+1] ----
    # hi/lo bf16 split keeps ~f32 precision while using plain bf16 MXU matmuls.
    r256 = jax.lax.broadcasted_iota(jnp.int32, (256, 128), 0)
    c128 = jax.lax.broadcasted_iota(jnp.int32, (256, 128), 1)
    pair_m = jnp.where((r256 >> 1) == c128, 1.0, 0.0).astype(bf16)
    lbl_hi = lbl.astype(bf16)
    lbl_lo = (lbl - lbl_hi.astype(f32)).astype(bf16)
    lblsum = (jnp.dot(lbl_hi, pair_m, preferred_element_type=f32)
              + jnp.dot(lbl_lo, pair_m, preferred_element_type=f32))   # (TBR, 128)

    # ---- per-sample log-softmax; each sample occupies cp consecutive lanes of a row ----
    x = logits_ref[...].astype(f32)                                    # (TBR, 128)
    m = jnp.max(x, axis=-1, keepdims=True)                             # shared per-row shift (exact math)
    z = x - m
    e = jnp.exp(z)
    shift = cp.bit_length() - 1                                        # cp is a power of two
    a_idx = jax.lax.broadcasted_iota(jnp.int32, (128, 128), 0)
    b_idx = jax.lax.broadcasted_iota(jnp.int32, (128, 128), 1)
    seg_m = jnp.where((a_idx >> shift) == (b_idx >> shift), 1.0, 0.0).astype(bf16)
    e_hi = e.astype(bf16)
    e_lo = (e - e_hi.astype(f32)).astype(bf16)
    se = (jnp.dot(e_hi, seg_m, preferred_element_type=f32)
          + jnp.dot(e_lo, seg_m, preferred_element_type=f32))          # per-sample sum(exp), broadcast
    neg_logp = jnp.log(se) - z                                         # -log_softmax

    contrib = lblsum * neg_logp                                        # (TBR, 128)
    if ragged:  # only the partial last block can contain garbage rows; added at trace time only
        row = jax.lax.broadcasted_iota(jnp.int32, contrib.shape, 0)
        valid = (pl.program_id(0) * tbr + row) < nr
        contrib = jnp.where(valid, contrib, 0.0)

    colsum = jnp.sum(contrib, axis=0, keepdims=True)                   # (1, 128)
    # lane-dense (8,128)-aligned per-tile partial (replicated over sublanes; wrapper divides by 8)
    out_ref[...] = jnp.broadcast_to(colsum[:, None, :], (1, 8, 128))


def distance_loss(model_outputs, distance, *, d1=0.5, d2=0.25, dt=0.3, tbr_max=2048):
    """Forward of DistanceLoss('temporal_object', learnable=False).

    model_outputs: (B, C) logits (f32 or bf16); distance: (B, C, 2) (f32/bf16).
    Returns the scalar loss (f32): mean(ce_temporal) + mean(ce_categorical).
    """
    B, C = model_outputs.shape
    assert distance.shape == (B, C, 2)
    if C > 128:
        # TODO(synk): support C > 128 (each sample would span multiple 128-lane rows).
        raise NotImplementedError("distance_loss Pallas kernel currently supports C <= 128")
    assert tbr_max % 8 == 0

    cp = _class_pad_target(C)
    if cp != C:
        # Self-masking class padding (logits -> -1e30 so softmax is unchanged; labels -> 0).
        lpad = jnp.full((B, cp - C), -1e30, dtype=model_outputs.dtype)
        model_outputs = jnp.concatenate([model_outputs, lpad], axis=1)
        dpad = jnp.stack([jnp.zeros((B, cp - C)), jnp.full((B, cp - C), 3.0)],
                         axis=-1).astype(distance.dtype)
        distance = jnp.concatenate([distance, dpad], axis=1)

    spr = 128 // cp                    # samples packed per 128-lane row
    bp = _round_up(B, spr)
    if bp != B:
        # Self-masking batch padding (labels are exactly 0 -> contributes nothing).
        n = bp - B
        model_outputs = jnp.concatenate(
            [model_outputs, jnp.zeros((n, cp), dtype=model_outputs.dtype)], axis=0)
        dpad = jnp.stack([jnp.zeros((n, cp)), jnp.full((n, cp), 3.0)],
                         axis=-1).astype(distance.dtype)
        distance = jnp.concatenate([distance, dpad], axis=0)

    nr = (bp * cp) // 128
    logits2d = model_outputs.reshape(nr, 128)   # free row-major reshape (no HBM copy)
    dist2d = distance.reshape(nr, 256)          # free reshape: row k matches logits row k

    tbr = nr if nr <= tbr_max else tbr_max
    grid_n = pl.cdiv(nr, tbr)
    ragged = (nr % tbr) != 0

    kernel = functools.partial(
        _distance_loss_kernel, cp=cp, d1=float(d1), d2=float(d2), dt=float(dt),
        nr=nr, tbr=tbr, ragged=ragged)

    out = pl.pallas_call(
        kernel,
        out_shape=jax.ShapeDtypeStruct((grid_n, 8, 128), jnp.float32),
        grid_spec=pltpu.PrefetchScalarGridSpec(
            num_scalar_prefetch=0,
            grid=(grid_n,),
            in_specs=[pl.BlockSpec((tbr, 128), lambda i: (i, 0)),
                      pl.BlockSpec((tbr, 256), lambda i: (i, 0))],
            out_specs=pl.BlockSpec((1, 8, 128), lambda i: (i, 0, 0)),
        ),
        compiler_params=pltpu.CompilerParams(
            dimension_semantics=("parallel",),          # independent partials -> v7x can use both TCs
            vmem_limit_bytes=48 * 1024 * 1024),         # large tiles also fit v5e's scoped VMEM
    )(logits2d, dist2d)

    # Partials are replicated across 8 sublanes (exact /8), mean divides by the *true* B.
    return jnp.sum(out) / (8.0 * B)


def distance_loss_ref(model_outputs, distance, *, d1=0.5, d2=0.25, dt=0.3):
    """Pure-JAX reference (mirrors the PyTorch module, learnable=False)."""
    logp = jax.nn.log_softmax(model_outputs.astype(jnp.float32), axis=1)
    dtv = distance[:, :, 0].astype(jnp.float32)
    lbl_t = jnp.where(dtv == 1.0, 1.0, jnp.where(dtv < 1.0, dtv * dt, dtv))
    dcv = distance[:, :, 1].astype(jnp.float32)
    lbl_c = jnp.where(dcv == 0.0, 1.0,
                      jnp.where(dcv == 1.0, d1,
                                jnp.where(dcv == 2.0, d2,
                                          jnp.where(dcv == 3.0, 0.0, dcv))))
    ce_t = -jnp.sum(lbl_t * logp, axis=1)
    ce_c = -jnp.sum(lbl_c * logp, axis=1)
    return jnp.mean(ce_t) + jnp.mean(ce_c)


def _make_inputs(key, B, C):
    k1, k2, k3 = jax.random.split(key, 3)
    model_outputs = jax.random.normal(k1, (B, C), dtype=jnp.float32)
    # temporal distances: exercises ==1, <1, ==0 and the pass-through (>1) branches
    d_temp = jax.random.choice(
        k2, jnp.array([0.0, 0.25, 0.5, 1.0, 2.0], dtype=jnp.float32), (B, C))
    # categorical distances: integer levels 0..3
    d_cat = jax.random.randint(k3, (B, C), 0, 4).astype(jnp.float32)
    distance = jnp.stack([d_temp, d_cat], axis=-1)  # (B, C, 2)
    return model_outputs, distance


if __name__ == "__main__":
    d1, d2, dt = 0.5, 0.25, 0.3   # non-learnable constructor values
    keys = jax.random.split(jax.random.PRNGKey(0), 4)

    def check(mo, dist, **kw):
        loss = jax.block_until_ready(distance_loss(mo, dist, d1=d1, d2=d2, dt=dt, **kw))
        ref = distance_loss_ref(mo, dist, d1=d1, d2=d2, dt=dt)
        assert jnp.allclose(loss, ref, rtol=5e-5, atol=1e-5), (loss, ref)

    # 1) B not a multiple of samples-per-row -> self-masking batch padding path.
    mo, dist = _make_inputs(keys[0], 37, 16)
    check(mo, dist)

    # 2) zero-copy path (no padding at all), multiple grid steps, ragged (partial) last block.
    mo, dist = _make_inputs(keys[1], 304, 16)
    check(mo, dist, tbr_max=16)

    # 3) bf16 distance (values exact in bf16) and a different class count (C = 8).
    mo, dist = _make_inputs(keys[2], 64, 8)
    check(mo, dist.astype(jnp.bfloat16))

    # 4) class count that does not divide 128 -> self-masking class padding path.
    mo, dist = _make_inputs(keys[3], 24, 10)
    check(mo, dist)

    # TODO(synk): learnable=True path (softplus on d1/d2/dt + per-row label normalization) and
    # C > 128 (sample spanning multiple 128-lane rows) are not implemented.
    print("KERNEL_OK")
</pallas_src>

<mosaic_0001>
module attributes {stable_mosaic.version = 11 : i64} {
  func.func @_distance_loss_kernel(%arg0: i32, %arg1: memref<5x128xf32, #tpu.memory_space<vmem>>, %arg2: memref<5x256xf32, #tpu.memory_space<vmem>>, %arg3: memref<1x8x128xf32, #tpu.memory_space<vmem>>) attributes {dimension_semantics = [#tpu.dimension_semantics<parallel>], iteration_bounds = array<i64: 1>, scalar_prefetch = 0 : i64, scratch_operands = 0 : i64, tpu.core_type = #tpu.core_type<tc>, window_params = [{transform_indices = @transform_0, window_bounds = array<i64: 5, 128>}, {transform_indices = @transform_1, window_bounds = array<i64: 5, 256>}, {transform_indices = @transform_2, window_bounds = array<i64: 1, 8, 128>}]} {
    %c0 = arith.constant 0 : index
    %c0_0 = arith.constant 0 : index
    %0 = vector.load %arg2[%c0, %c0_0] : memref<5x256xf32, #tpu.memory_space<vmem>>, vector<5x256xf32>
    %cst = arith.constant 1.000000e+00 : f32
    %1 = vector.broadcast %cst : f32 to vector<5x256xf32>
    %2 = arith.cmpf oeq, %0, %1 : vector<5x256xf32>
    %cst_1 = arith.constant 1.000000e+00 : f32
    %3 = vector.broadcast %cst_1 : f32 to vector<5x256xf32>
    %4 = arith.cmpf olt, %0, %3 : vector<5x256xf32>
    %cst_2 = arith.constant 3.000000e-01 : f32
    %5 = vector.broadcast %cst_2 : f32 to vector<5x256xf32>
    %6 = arith.mulf %0, %5 : vector<5x256xf32>
    %7 = arith.select %4, %6, %0 : vector<5x256xi1>, vector<5x256xf32>
    %cst_3 = arith.constant 1.000000e+00 : f32
    %8 = vector.broadcast %cst_3 : f32 to vector<5x256xf32>
    %9 = arith.select %2, %8, %7 : vector<5x256xi1>, vector<5x256xf32>
    %cst_4 = arith.constant 0.000000e+00 : f32
    %10 = vector.broadcast %cst_4 : f32 to vector<5x256xf32>
    %11 = arith.cmpf oeq, %0, %10 : vector<5x256xf32>
    %cst_5 = arith.constant 1.000000e+00 : f32
    %12 = vector.broadcast %cst_5 : f32 to vector<5x256xf32>
    %13 = arith.cmpf oeq, %0, %12 : vector<5x256xf32>
    %cst_6 = arith.constant 2.000000e+00 : f32
    %14 = vector.broadcast %cst_6 : f32 to vector<5x256xf32>
    %15 = arith.cmpf oeq, %0, %14 : vector<5x256xf32>
    %cst_7 = arith.constant 3.000000e+00 : f32
    %16 = vector.broadcast %cst_7 : f32 to vector<5x256xf32>
    %17 = arith.cmpf oeq, %0, %16 : vector<5x256xf32>
    %cst_8 = arith.constant 0.000000e+00 : f32
    %18 = vector.broadcast %cst_8 : f32 to vector<5x256xf32>
    %19 = arith.select %17, %18, %0 : vector<5x256xi1>, vector<5x256xf32>
    %cst_9 = arith.constant 2.500000e-01 : f32
    %20 = vector.broadcast %cst_9 : f32 to vector<5x256xf32>
    %21 = arith.select %15, %20, %19 : vector<5x256xi1>, vector<5x256xf32>
    %cst_10 = arith.constant 5.000000e-01 : f32
    %22 = vector.broadcast %cst_10 : f32 to vector<5x256xf32>
    %23 = arith.select %13, %22, %21 : vector<5x256xi1>, vector<5x256xf32>
    %cst_11 = arith.constant 1.000000e+00 : f32
    %24 = vector.broadcast %cst_11 : f32 to vector<5x256xf32>
    %25 = arith.select %11, %24, %23 : vector<5x256xi1>, vector<5x256xf32>
    %26 = tpu.iota {dimensions = array<i32: 1>} : vector<5x256xi32>
    %c1_i32 = arith.constant 1 : i32
    %27 = vector.broadcast %c1_i32 : i32 to vector<5x256xi32>
    %28 = arith.andi %26, %27 : vector<5x256xi32>
    %c0_i32 = arith.constant 0 : i32
    %29 = vector.broadcast %c0_i32 : i32 to vector<5x256xi32>
    %30 = arith.cmpi eq, %28, %29 : vector<5x256xi32>
    %31 = arith.select %30, %9, %25 : vector<5x256xi1>, vector<5x256xf32>
    %32 = tpu.iota {dimensions = array<i32: 0>} : vector<256x128xi32>
    %33 = tpu.iota {dimensions = array<i32: 1>} : vector<256x128xi32>
    %c1_i32_12 = arith.constant 1 : i32
    %34 = vector.broadcast %c1_i32_12 : i32 to vector<256x128xi32>
    %35 = arith.shrsi %32, %34 : vector<256x128xi32>
    %36 = arith.cmpi eq, %35, %33 : vector<256x128xi32>
    %cst_13 = arith.constant 1.000000e+00 : f32
    %cst_14 = arith.constant 0.000000e+00 : f32
    %37 = vector.broadcast %cst_13 : f32 to vector<256x128xf32>
    %38 = vector.broadcast %cst_14 : f32 to vector<256x128xf32>
    %39 = arith.select %36, %37, %38 : vector<256x128xi1>, vector<256x128xf32>
    %40 = arith.truncf %39 : vector<256x128xf32> to vector<256x128xbf16>
    %41 = arith.truncf %31 : vector<5x256xf32> to vector<5x256xbf16>
    %42 = arith.extf %41 : vector<5x256xbf16> to vector<5x256xf32>
    %43 = arith.subf %31, %42 : vector<5x256xf32>
    %44 = arith.truncf %43 : vector<5x256xf32> to vector<5x256xbf16>
    %cst_15 = arith.constant dense<0.000000e+00> : vector<5x128xf32>
    %45 = tpu.matmul %41, %40, %cst_15 {dimension_numbers = #tpu.dot_dimension_numbers<[1], [0], [0], [1], [0, 0, 1, 1], [], []>} : vector<5x256xbf16>, vector<256x128xbf16>, vector<5x128xf32> -> vector<5x128xf32>
    %cst_16 = arith.constant dense<0.000000e+00> : vector<5x128xf32>
    %46 = tpu.matmul %44, %40, %cst_16 {dimension_numbers = #tpu.dot_dimension_numbers<[1], [0], [0], [1], [0, 0, 1, 1], [], []>} : vector<5x256xbf16>, vector<256x128xbf16>, vector<5x128xf32> -> vector<5x128xf32>
    %47 = arith.addf %45, %46 : vector<5x128xf32>
    %c0_17 = arith.constant 0 : index
    %c0_18 = arith.constant 0 : index
    %48 = vector.load %arg1[%c0_17, %c0_18] : memref<5x128xf32, #tpu.memory_space<vmem>>, vector<5x128xf32>
    %cst_19 = arith.constant dense<0xFF800000> : vector<5xf32>
    %49 = vector.multi_reduction <maximumf>, %48, %cst_19 [1] : vector<5x128xf32> to vector<5xf32>
    %50 = vector.shape_cast %49 : vector<5xf32> to vector<5x1xf32>
    %51 = vector.broadcast %50 : vector<5x1xf32> to vector<5x128xf32>
    %52 = arith.subf %48, %51 : vector<5x128xf32>
    %53 = math.exp %52 : vector<5x128xf32>
    %54 = tpu.iota {dimensions = array<i32: 0>} : vector<128x128xi32>
    %55 = tpu.iota {dimensions = array<i32: 1>} : vector<128x128xi32>
    %c4_i32 = arith.constant 4 : i32
    %56 = vector.broadcast %c4_i32 : i32 to vector<128x128xi32>
    %57 = arith.shrsi %54, %56 : vector<128x128xi32>
    %c4_i32_20 = arith.constant 4 : i32
    %58 = vector.broadcast %c4_i32_20 : i32 to vector<128x128xi32>
    %59 = arith.shrsi %55, %58 : vector<128x128xi32>
    %60 = arith.cmpi eq, %57, %59 : vector<128x128xi32>
    %cst_21 = arith.constant 1.000000e+00 : f32
    %cst_22 = arith.constant 0.000000e+00 : f32
    %61 = vector.broadcast %cst_21 : f32 to vector<128x128xf32>
    %62 = vector.broadcast %cst_22 : f32 to vector<128x128xf32>
    %63 = arith.select %60, %61, %62 : vector<128x128xi1>, vector<128x128xf32>
    %64 = arith.truncf %63 : vector<128x128xf32> to vector<128x128xbf16>
    %65 = arith.truncf %53 : vector<5x128xf32> to vector<5x128xbf16>
    %66 = arith.extf %65 : vector<5x128xbf16> to vector<5x128xf32>
    %67 = arith.subf %53, %66 : vector<5x128xf32>
    %68 = arith.truncf %67 : vector<5x128xf32> to vector<5x128xbf16>
    %cst_23 = arith.constant dense<0.000000e+00> : vector<5x128xf32>
    %69 = tpu.matmul %65, %64, %cst_23 {dimension_numbers = #tpu.dot_dimension_numbers<[1], [0], [0], [1], [0, 0, 1, 1], [], []>} : vector<5x128xbf16>, vector<128x128xbf16>, vector<5x128xf32> -> vector<5x128xf32>
    %cst_24 = arith.constant dense<0.000000e+00> : vector<5x128xf32>
    %70 = tpu.matmul %68, %64, %cst_24 {dimension_numbers = #tpu.dot_dimension_numbers<[1], [0], [0], [1], [0, 0, 1, 1], [], []>} : vector<5x128xbf16>, vector<128x128xbf16>, vector<5x128xf32> -> vector<5x128xf32>
    %71 = arith.addf %69, %70 : vector<5x128xf32>
    %72 = math.log %71 : vector<5x128xf32>
    %73 = arith.subf %72, %52 : vector<5x128xf32>
    %74 = arith.mulf %47, %73 : vector<5x128xf32>
    %cst_25 = arith.constant dense<0.000000e+00> : vector<128xf32>
    %75 = vector.multi_reduction <add>, %74, %cst_25 [0] : vector<5x128xf32> to vector<128xf32>
    %76 = vector.shape_cast %75 : vector<128xf32> to vector<1x128xf32>
    %77 = vector.shape_cast %76 : vector<1x128xf32> to vector<1x1x128xf32>
    %78 = vector.shape_cast %77 : vector<1x1x128xf32> to vector<1x1x128xf32>
    %79 = vector.broadcast %78 : vector<1x1x128xf32> to vector<1x8x128xf32>
    %c0_26 = arith.constant 0 : index
    %c0_27 = arith.constant 0 : index
    %c0_28 = arith.constant 0 : index
    %80 = vector.load %arg3[%c0_26, %c0_27, %c0_28] : memref<1x8x128xf32, #tpu.memory_space<vmem>>, vector<1x8x128xf32>
    tpu.vector_store %arg3[%c0_26, %c0_27, %c0_28], %79 {strides = array<i32>} : memref<1x8x128xf32, #tpu.memory_space<vmem>>, vector<1x8x128xf32>,
    return
  }
  func.func @transform_0(%arg0: i32) -> (i32, i32) {
    %c0_i32 = arith.constant 0 : i32
    %c0_i32_0 = arith.constant 0 : i32
    return %arg0, %c0_i32 : i32, i32
  }
  func.func @transform_1(%arg0: i32) -> (i32, i32) {
    %c0_i32 = arith.constant 0 : i32
    %c0_i32_0 = arith.constant 0 : i32
    return %arg0, %c0_i32 : i32, i32
  }
  func.func @transform_2(%arg0: i32) -> (i32, i32, i32) {
    %c0_i32 = arith.constant 0 : i32
    %c0_i32_0 = arith.constant 0 : i32
    %c0_i32_1 = arith.constant 0 : i32
    return %arg0, %c0_i32, %c0_i32_0 : i32, i32, i32
  }
}

</mosaic_0001>

<llo_original>
// kernel: tpu_custom_call.1
$region0: #{tpu_custom_call.1}
  #allocation0 [shape = 'u32[]', space=smem, size = 0x4, offset = 0x4, fixed_abs, tag = 'smem constant byte address 0x4 - core index']
  #allocation1 [shape = 'u32[144,128]{1,0:T(1,128)}', space=vmem, size = 0x12000, scoped, tag = 'internal scratch']
  %s0 = inlined_call_operand.hbm [shape: f32[5,128], index: 0, kind: input, shape index: {}]
  %s1 = inlined_call_operand.hbm [shape: f32[5,256], index: 1, kind: input, shape index: {}]
  %s2 = inlined_call_operand.hbm [shape: f32[1,8,128], index: 2, kind: output, shape index: {}]
  %s3 = sld [smem:[#allocation0]]
  $region26: #{tpu_custom_call.1} parent=0
    _
  %s5 = ssub.s32 1, %s3
  %s6 = scalar_select 0, %s5, %s3
  $region1: #{tpu_custom_call.1} parent=0
    #allocation2 [shape = 'u8[4096]{0}', space=vmem, size = 0x1000, scoped, tag = 'input window, operand 0, single buffered']
    #allocation3 [shape = 's32[1]{0}', space=sflag, size = 0x4, scoped, tag = 'scoped memory for tpu_custom_call.1']
    #allocation4 [shape = 's32[1]{0}', space=sflag, size = 0x4, scoped, tag = 'scoped memory for tpu_custom_call.1']
    #allocation5 [shape = 'u8[8192]{0}', space=vmem, size = 0x2000, scoped, tag = 'input window, operand 1, single buffered']
    #allocation6 [shape = 's32[1]{0}', space=sflag, size = 0x4, scoped, tag = 'scoped memory for tpu_custom_call.1']
    #allocation7 [shape = 'u8[4096]{0}', space=vmem, size = 0x1000, scoped, tag = 'output window, operand 0, single buffered']
    %7 = vsyncpa [#allocation3], 0
    %8 = vsyncpa [#allocation6], 0
    %9 = vsyncpa [#allocation4], 0
    // Predicated region
    $region2: #{tpu_custom_call.1} parent=1 // pred_check
      _
    $region3: #{tpu_custom_call.1} parent=1 // pred_check_branch
      %11 = sbr.rel (0) target = $region5
    $region4: #{tpu_custom_call.1} parent=1 // pred_region
      %s13 = ssub.s32 128, 128
      %14 = vsyncadd [#allocation3], %s13
      %s16 = sshll.u32 [#allocation2], 4
      %s17 = int_to_ptr.vmem [resolvable:$true] %s16
      %19 = dma.hbm_to_vmem [thread:$0]  %s0, 128, %s17, [#allocation3]
    $region5: #{tpu_custom_call.1} parent=1 // pred_fallthru
      _
    // Predicated region
    $region6: #{tpu_custom_call.1} parent=1 // pred_check
      _
    $region7: #{tpu_custom_call.1} parent=1 // pred_check_branch
      %21 = sbr.rel (0) target = $region9
    $region8: #{tpu_custom_call.1} parent=1 // pred_region
      %s23 = ssub.s32 256, 256
      %24 = vsyncadd [#allocation6], %s23
      %s26 = sshll.u32 [#allocation5], 4
      %s27 = int_to_ptr.vmem [resolvable:$true] %s26
      %29 = dma.hbm_to_vmem [thread:$0]  %s1, 256, %s27, [#allocation6]
    $region9: #{tpu_custom_call.1} parent=1 // pred_fallthru
      _
    // Predicated region
    $region10: #{tpu_custom_call.1} parent=1 // pred_check
      _
    $region11: #{tpu_custom_call.1} parent=1 // pred_check_branch
      %31 = sbr.rel (0) target = $region13
    $region12: #{tpu_custom_call.1} parent=1 // pred_region
      %32 = dma.done [#allocation3], 128
    $region13: #{tpu_custom_call.1} parent=1 // pred_fallthru
      _
    // Predicated region
    $region14: #{tpu_custom_call.1} parent=1 // pred_check
      _
    $region15: #{tpu_custom_call.1} parent=1 // pred_check_branch
      %34 = sbr.rel (0) target = $region17
    $region16: #{tpu_custom_call.1} parent=1 // pred_region
      %35 = dma.done [#allocation6], 256
    $region17: #{tpu_custom_call.1} parent=1 // pred_fallthru
      _
    %v37 = vld [vmem:[#allocation5] sm:$0x1f]
    %v38 = vld [vmem:[#allocation5 + $0x8] sm:$0x1f]
    %vm39 = vcmp.eq.f32.partialorder %v37, 1.0
    %vm40 = vcmp.eq.f32.partialorder %v38, 1.0
    %vm41 = vcmp.lt.f32.partialorder %v37, 1.0
    %vm42 = vcmp.lt.f32.partialorder %v38, 1.0
    %v43 = vmul.f32 %v37, 0.3
    %v44 = vmul.f32 %v38, 0.3
    %v45 = vsel %vm41, %v43, %v37
    %v46 = vsel %vm42, %v44, %v38
    %v47 = vsel %vm39, 1.0, %v45
    %v48 = vsel %vm40, 1.0, %v46
    %vm49 = vcmp.eq.f32.partialorder %v37, 0.0
    %vm50 = vcmp.eq.f32.partialorder %v38, 0.0
    %vm51 = vcmp.eq.f32.partialorder %v37, 2.0
    %vm52 = vcmp.eq.f32.partialorder %v38, 2.0
    %vm53 = vcmp.eq.f32.partialorder %v37, 3.0
    %vm54 = vcmp.eq.f32.partialorder %v38, 3.0
    %v55 = vsel %vm53, 0.0, %v37
    %v56 = vsel %vm54, 0.0, %v38
    %v57 = vsel %vm51, 0.25, %v55
    %v58 = vsel %vm52, 0.25, %v56
    %v59 = vsel %vm39, 0.5, %v57
    %v60 = vsel %vm40, 0.5, %v58
    %v61 = vsel %vm49, 1.0, %v59
    %v62 = vsel %vm50, 1.0, %v60
    %v63 = vlaneseq
    %v64 = vand.u32 %v63, 127
    %v65 = vadd.s32 %v64, 128
    %v66 = vand.u32 %v64, 1
    %v67 = vand.u32 %v65, 1
    %vm68 = vcmp.eq.s32.totalorder %v66, 0
    %vm69 = vcmp.eq.s32.totalorder %v67, 0
    %v70 = vsel %vm68, %v47, %v61
    %v71 = vsel %vm69, %v48, %v62
    %v72 = vlaneseq
    %v73 = vshrl.u32 %v72, 7
    %v74 = vadd.s32 %v73, 8
    %v75 = vadd.s32 %v73, 16
    %v76 = vadd.s32 %v73, 24
    %v77 = vadd.s32 %v73, 32
    %v78 = vadd.s32 %v73, 40
    %v79 = vadd.s32 %v73, 48
    %v80 = vadd.s32 %v73, 56
    %v81 = vadd.s32 %v73, 64
    %v82 = vadd.s32 %v73, 72
    %v83 = vadd.s32 %v73, 80
    %v84 = vadd.s32 %v73, 88
    %v85 = vadd.s32 %v73, 96
    %v86 = vadd.s32 %v73, 104
    %v87 = vadd.s32 %v73, 112
    %v88 = vadd.s32 %v73, 120
    %v89 = vadd.s32 %v73, 128
    %v90 = vadd.s32 %v73, 136
    %v91 = vadd.s32 %v73, 144
    %v92 = vadd.s32 %v73, 152
    %v93 = vadd.s32 %v73, 160
    %v94 = vadd.s32 %v73, 168
    %v95 = vadd.s32 %v73, 176
    %v96 = vadd.s32 %v73, 184
    %v97 = vadd.s32 %v73, 192
    %v98 = vadd.s32 %v73, 200
    %v99 = vadd.s32 %v73, 208
    %v100 = vadd.s32 %v73, 216
    %v101 = vadd.s32 %v73, 224
    %v102 = vadd.s32 %v73, 232
    %v103 = vadd.s32 %v73, 240
    %v104 = vadd.s32 %v73, 248
    %v105 = vshra.s32 %v73, 1
    %v106 = vshra.s32 %v74, 1
    %v107 = vshra.s32 %v75, 1
    %v108 = vshra.s32 %v76, 1
    %v109 = vshra.s32 %v77, 1
    %v110 = vshra.s32 %v78, 1
    %v111 = vshra.s32 %v79, 1
    %v112 = vshra.s32 %v80, 1
    %v113 = vshra.s32 %v81, 1
    %v114 = vshra.s32 %v82, 1
    %v115 = vshra.s32 %v83, 1
    %v116 = vshra.s32 %v84, 1
    %v117 = vshra.s32 %v85, 1
    %v118 = vshra.s32 %v86, 1
    %v119 = vshra.s32 %v87, 1
    %v120 = vshra.s32 %v88, 1
    %v121 = vshra.s32 %v89, 1
    %v122 = vshra.s32 %v90, 1
    %v123 = vshra.s32 %v91, 1
    %v124 = vshra.s32 %v92, 1
    %v125 = vshra.s32 %v93, 1
    %v126 = vshra.s32 %v94, 1
    %v127 = vshra.s32 %v95, 1
    %v128 = vshra.s32 %v96, 1
    %v129 = vshra.s32 %v97, 1
    %v130 = vshra.s32 %v98, 1
    %v131 = vshra.s32 %v99, 1
    %v132 = vshra.s32 %v100, 1
    %v133 = vshra.s32 %v101, 1
    %v134 = vshra.s32 %v102, 1
    %v135 = vshra.s32 %v103, 1
    %v136 = vshra.s32 %v104, 1
    %vm137 = vcmp.eq.s32.totalorder %v105, %v64
    %vm138 = vcmp.eq.s32.totalorder %v106, %v64
    %vm139 = vcmp.eq.s32.totalorder %v107, %v64
    %vm140 = vcmp.eq.s32.totalorder %v108, %v64
    %vm141 = vcmp.eq.s32.totalorder %v109, %v64
    %vm142 = vcmp.eq.s32.totalorder %v110, %v64
    %vm143 = vcmp.eq.s32.totalorder %v111, %v64
    %vm144 = vcmp.eq.s32.totalorder %v112, %v64
    %vm145 = vcmp.eq.s32.totalorder %v113, %v64
    %vm146 = vcmp.eq.s32.totalorder %v114, %v64
    %vm147 = vcmp.eq.s32.totalorder %v115, %v64
    %vm148 = vcmp.eq.s32.totalorder %v116, %v64
    %vm149 = vcmp.eq.s32.totalorder %v117, %v64
    %vm150 = vcmp.eq.s32.totalorder %v118, %v64
    %vm151 = vcmp.eq.s32.totalorder %v119, %v64
    %vm152 = vcmp.eq.s32.totalorder %v120, %v64
    %vm153 = vcmp.eq.s32.totalorder %v121, %v64
    %vm154 = vcmp.eq.s32.totalorder %v122, %v64
    %vm155 = vcmp.eq.s32.totalorder %v123, %v64
    %vm156 = vcmp.eq.s32.totalorder %v124, %v64
    %vm157 = vcmp.eq.s32.totalorder %v125, %v64
    %vm158 = vcmp.eq.s32.totalorder %v126, %v64
    %vm159 = vcmp.eq.s32.totalorder %v127, %v64
    %vm160 = vcmp.eq.s32.totalorder %v128, %v64
    %vm161 = vcmp.eq.s32.totalorder %v129, %v64
    %vm162 = vcmp.eq.s32.totalorder %v130, %v64
    %vm163 = vcmp.eq.s32.totalorder %v131, %v64
    %vm164 = vcmp.eq.s32.totalorder %v132, %v64
    %vm165 = vcmp.eq.s32.totalorder %v133, %v64
    %vm166 = vcmp.eq.s32.totalorder %v134, %v64
    %vm167 = vcmp.eq.s32.totalorder %v135, %v64
    %vm168 = vcmp.eq.s32.totalorder %v136, %v64
    %v169 = vsel %vm137, 1.0, 0.0
    %v170 = vsel %vm138, 1.0, 0.0
    %v171 = vsel %vm139, 1.0, 0.0
    %v172 = vsel %vm140, 1.0, 0.0
    %v173 = vsel %vm141, 1.0, 0.0
    %v174 = vsel %vm142, 1.0, 0.0
    %v175 = vsel %vm143, 1.0, 0.0
    %v176 = vsel %vm144, 1.0, 0.0
    %v177 = vsel %vm145, 1.0, 0.0
    %v178 = vsel %vm146, 1.0, 0.0
    %v179 = vsel %vm147, 1.0, 0.0
    %v180 = vsel %vm148, 1.0, 0.0
    %v181 = vsel %vm149, 1.0, 0.0
    %v182 = vsel %vm150, 1.0, 0.0
    %v183 = vsel %vm151, 1.0, 0.0
    %v184 = vsel %vm152, 1.0, 0.0
    %v185 = vsel %vm153, 1.0, 0.0
    %v186 = vsel %vm154, 1.0, 0.0
    %v187 = vsel %vm155, 1.0, 0.0
    %v188 = vsel %vm156, 1.0, 0.0
    %v189 = vsel %vm157, 1.0, 0.0
    %v190 = vsel %vm158, 1.0, 0.0
    %v191 = vsel %vm159, 1.0, 0.0
    %v192 = vsel %vm160, 1.0, 0.0
    %v193 = vsel %vm161, 1.0, 0.0
    %v194 = vsel %vm162, 1.0, 0.0
    %v195 = vsel %vm163, 1.0, 0.0
    %v196 = vsel %vm164, 1.0, 0.0
    %v197 = vsel %vm165, 1.0, 0.0
    %v198 = vsel %vm166, 1.0, 0.0
    %v199 = vsel %vm167, 1.0, 0.0
    %v200 = vsel %vm168, 1.0, 0.0
    %v201 = vpack.c.bf16 %v170, %v169
    %v202 = vpack.c.bf16 %v172, %v171
    %v203 = vpack.c.bf16 %v174, %v173
    %v204 = vpack.c.bf16 %v176, %v175
    %v205 = vpack.c.bf16 %v178, %v177
    %v206 = vpack.c.bf16 %v180, %v179
    %v207 = vpack.c.bf16 %v182, %v181
    %v208 = vpack.c.bf16 %v184, %v183
    %v209 = vpack.c.bf16 %v186, %v185
    %v210 = vpack.c.bf16 %v188, %v187
    %v211 = vpack.c.bf16 %v190, %v189
    %v212 = vpack.c.bf16 %v192, %v191
    %v213 = vpack.c.bf16 %v194, %v193
    %v214 = vpack.c.bf16 %v196, %v195
    %v215 = vpack.c.bf16 %v198, %v197
    %v216 = vpack.c.bf16 %v200, %v199
    %v217 = vpack.c.bf16 %v70, %v70
    %v218 = vpack.c.bf16 %v71, %v71
    %v219 = vunpack.c.l.bf16 %v217
    %v220 = vunpack.c.l.bf16 %v218
    %v221 = vsub.f32 %v70, %v219
    %v222 = vsub.f32 %v71, %v220
    %v223 = vpack.c.bf16 %v221, %v221
    %v224 = vpack.c.bf16 %v222, %v222
    %225 = vmatprep.subr.bf16.mxu0 0
    %226 = vmatpush1.bf16.msra.mxu0 %v201
    %227 = vmatprep.subr.bf16.mxu0 0
    %228 = vmatpush1.bf16.msra.mxu0 %v202
    %229 = vmatprep.subr.bf16.mxu0 0
    %230 = vmatpush1.bf16.msra.mxu0 %v203
    %231 = vmatprep.subr.bf16.mxu0 0
    %232 = vmatpush1.bf16.msra.mxu0 %v204
    %233 = vmatprep.subr.bf16.mxu0 0
    %234 = vmatpush1.bf16.msra.mxu0 %v205
    %235 = vmatprep.subr.bf16.mxu0 0
    %236 = vmatpush1.bf16.msra.mxu0 %v206
    %237 = vmatprep.subr.bf16.mxu0 0
    %238 = vmatpush1.bf16.msra.mxu0 %v207
    %239 = vmatprep.subr.bf16.mxu0 0
    %240 = vmatpush1.bf16.msra.mxu0 %v208
    %241 = vmatprep.subr.bf16.mxu0 0
    %242 = vmatpush1.bf16.msra.mxu0 %v209
    %243 = vmatprep.subr.bf16.mxu0 0
    %244 = vmatpush1.bf16.msra.mxu0 %v210
    %245 = vmatprep.subr.bf16.mxu0 0
    %246 = vmatpush1.bf16.msra.mxu0 %v211
    %247 = vmatprep.subr.bf16.mxu0 0
    %248 = vmatpush1.bf16.msra.mxu0 %v212
    %249 = vmatprep.subr.bf16.mxu0 0
    %250 = vmatpush1.bf16.msra.mxu0 %v213
    %251 = vmatprep.subr.bf16.mxu0 0
    %252 = vmatpush1.bf16.msra.mxu0 %v214
    %253 = vmatprep.subr.bf16.mxu0 0
    %254 = vmatpush1.bf16.msra.mxu0 %v215
    %255 = vmatprep.subr.bf16.mxu0 0
    %256 = vmatpush1.bf16.msra.mxu0 %v216
    %257 = vmatprep.mubr.bf16.mxu0 %v224
    %258 = vmatmul.mubr.bf16.gmra.mrb[0].mxu0 %v223
    %v259 = vpop.f32.mrb[0].mxu0
    %v260 = vadd.f32 0.0, %v259
    %v261 = vpop.f32.mrb[0].mxu0
    %v262 = vpop.f32.mrb[0].mxu0
    %v263 = vpop.f32.mrb[0].mxu0
    %264 = vdwg.mxu0
    %265 = vmatprep.subr.bf16.mxu0 0
    %266 = vmatpush1.bf16.msra.mxu0 %v201
    %267 = vmatprep.subr.bf16.mxu0 0
    %268 = vmatpush1.bf16.msra.mxu0 %v202
    %269 = vmatprep.subr.bf16.mxu0 0
    %270 = vmatpush1.bf16.msra.mxu0 %v203
    %271 = vmatprep.subr.bf16.mxu0 0
    %272 = vmatpush1.bf16.msra.mxu0 %v204
    %273 = vmatprep.subr.bf16.mxu0 0
    %274 = vmatpush1.bf16.msra.mxu0 %v205
    %275 = vmatprep.subr.bf16.mxu0 0
    %276 = vmatpush1.bf16.msra.mxu0 %v206
    %277 = vmatprep.subr.bf16.mxu0 0
    %278 = vmatpush1.bf16.msra.mxu0 %v207
    %279 = vmatprep.subr.bf16.mxu0 0
    %280 = vmatpush1.bf16.msra.mxu0 %v208
    %281 = vmatprep.subr.bf16.mxu0 0
    %282 = vmatpush1.bf16.msra.mxu0 %v209
    %283 = vmatprep.subr.bf16.mxu0 0
    %284 = vmatpush1.bf16.msra.mxu0 %v210
    %285 = vmatprep.subr.bf16.mxu0 0
    %286 = vmatpush1.bf16.msra.mxu0 %v211
    %287 = vmatprep.subr.bf16.mxu0 0
    %288 = vmatpush1.bf16.msra.mxu0 %v212
    %289 = vmatprep.subr.bf16.mxu0 0
    %290 = vmatpush1.bf16.msra.mxu0 %v213
    %291 = vmatprep.subr.bf16.mxu0 0
    %292 = vmatpush1.bf16.msra.mxu0 %v214
    %293 = vmatprep.subr.bf16.mxu0 0
    %294 = vmatpush1.bf16.msra.mxu0 %v215
    %295 = vmatprep.subr.bf16.mxu0 0
    %296 = vmatpush1.bf16.msra.mxu0 %v216
    %297 = vmatprep.mubr.bf16.mxu0 %v218
    %298 = vmatmul.mubr.bf16.gmra.mrb[0].mxu0 %v217
    %v299 = vpop.f32.mrb[0].mxu0
    %v300 = vadd.f32 %v260, %v299
    %v301 = vpop.f32.mrb[0].mxu0
    %v302 = vpop.f32.mrb[0].mxu0
    %v303 = vpop.f32.mrb[0].mxu0
    %304 = vdwg.mxu0
    %v305 = vld [vmem:[#allocation2] sm:$0x1f]
    %vm306 = vcmask 1044480
    %v307 = vsel %vm306, %v305, -inf
    %308 = vmax.xlane.f32.xlu0 %v307
    %v309 = vpop.xlane.xlu0 %308
    %v310 = vsub.f32 %v305, %v309
    %v311 = vmul.f32 %v310, 1.442695
    %v312 = vpow.pop %v311
    %v313 = vshra.s32 %v73, 4
    %v314 = vshra.s32 %v74, 4
    %v315 = vshra.s32 %v75, 4
    %v316 = vshra.s32 %v76, 4
    %v317 = vshra.s32 %v77, 4
    %v318 = vshra.s32 %v78, 4
    %v319 = vshra.s32 %v79, 4
    %v320 = vshra.s32 %v80, 4
    %v321 = vshra.s32 %v81, 4
    %v322 = vshra.s32 %v82, 4
    %v323 = vshra.s32 %v83, 4
    %v324 = vshra.s32 %v84, 4
    %v325 = vshra.s32 %v85, 4
    %v326 = vshra.s32 %v86, 4
    %v327 = vshra.s32 %v87, 4
    %v328 = vshra.s32 %v88, 4
    %v329 = vshra.s32 %v64, 4
    %vm330 = vcmp.eq.s32.totalorder %v313, %v329
    %vm331 = vcmp.eq.s32.totalorder %v314, %v329
    %vm332 = vcmp.eq.s32.totalorder %v315, %v329
    %vm333 = vcmp.eq.s32.totalorder %v316, %v329
    %vm334 = vcmp.eq.s32.totalorder %v317, %v329
    %vm335 = vcmp.eq.s32.totalorder %v318, %v329
    %vm336 = vcmp.eq.s32.totalorder %v319, %v329
    %vm337 = vcmp.eq.s32.totalorder %v320, %v329
    %vm338 = vcmp.eq.s32.totalorder %v321, %v329
    %vm339 = vcmp.eq.s32.totalorder %v322, %v329
    %vm340 = vcmp.eq.s32.totalorder %v323, %v329
    %vm341 = vcmp.eq.s32.totalorder %v324, %v329
    %vm342 = vcmp.eq.s32.totalorder %v325, %v329
    %vm343 = vcmp.eq.s32.totalorder %v326, %v329
    %vm344 = vcmp.eq.s32.totalorder %v327, %v329
    %vm345 = vcmp.eq.s32.totalorder %v328, %v329
    %v346 = vsel %vm330, 1.0, 0.0
    %v347 = vsel %vm331, 1.0, 0.0
    %v348 = vsel %vm332, 1.0, 0.0
    %v349 = vsel %vm333, 1.0, 0.0
    %v350 = vsel %vm334, 1.0, 0.0
    %v351 = vsel %vm335, 1.0, 0.0
    %v352 = vsel %vm336, 1.0, 0.0
    %v353 = vsel %vm337, 1.0, 0.0
    %v354 = vsel %vm338, 1.0, 0.0
    %v355 = vsel %vm339, 1.0, 0.0
    %v356 = vsel %vm340, 1.0, 0.0
    %v357 = vsel %vm341, 1.0, 0.0
    %v358 = vsel %vm342, 1.0, 0.0
    %v359 = vsel %vm343, 1.0, 0.0
    %v360 = vsel %vm344, 1.0, 0.0
    %v361 = vsel %vm345, 1.0, 0.0
    %v362 = vpack.c.bf16 %v347, %v346
    %v363 = vpack.c.bf16 %v349, %v348
    %v364 = vpack.c.bf16 %v351, %v350
    %v365 = vpack.c.bf16 %v353, %v352
    %v366 = vpack.c.bf16 %v355, %v354
    %v367 = vpack.c.bf16 %v357, %v356
    %v368 = vpack.c.bf16 %v359, %v358
    %v369 = vpack.c.bf16 %v361, %v360
    %v370 = vpack.c.bf16 %v312, %v312
    %v371 = vunpack.c.l.bf16 %v370
    %v372 = vsub.f32 %v312, %v371
    %v373 = vpack.c.bf16 %v372, %v372
    %374 = vmatprep.subr.bf16.mxu0 0
    %375 = vmatpush1.bf16.msra.mxu0 %v362
    %376 = vmatprep.subr.bf16.mxu0 0
    %377 = vmatpush1.bf16.msra.mxu0 %v363
    %378 = vmatprep.subr.bf16.mxu0 0
    %379 = vmatpush1.bf16.msra.mxu0 %v364
    %380 = vmatprep.subr.bf16.mxu0 0
    %381 = vmatpush1.bf16.msra.mxu0 %v365
    %382 = vmatprep.subr.bf16.mxu0 0
    %383 = vmatpush1.bf16.msra.mxu0 %v366
    %384 = vmatprep.subr.bf16.mxu0 0
    %385 = vmatpush1.bf16.msra.mxu0 %v367
    %386 = vmatprep.subr.bf16.mxu0 0
    %387 = vmatpush1.bf16.msra.mxu0 %v368
    %388 = vmatprep.subr.bf16.mxu0 0
    %389 = vmatpush1.bf16.msra.mxu0 %v369
    %390 = vmatprep.subr.bf16.mxu0 0
    %391 = vmatpush1.bf16.msra.mxu0 0
    %392 = vmatprep.subr.bf16.mxu0 0
    %393 = vmatpush1.bf16.msra.mxu0 0
    %394 = vmatprep.subr.bf16.mxu0 0
    %395 = vmatpush1.bf16.msra.mxu0 0
    %396 = vmatprep.subr.bf16.mxu0 0
    %397 = vmatpush1.bf16.msra.mxu0 0
    %398 = vmatprep.subr.bf16.mxu0 0
    %399 = vmatpush1.bf16.msra.mxu0 0
    %400 = vmatprep.subr.bf16.mxu0 0
    %401 = vmatpush1.bf16.msra.mxu0 0
    %402 = vmatprep.subr.bf16.mxu0 0
    %403 = vmatpush1.bf16.msra.mxu0 0
    %404 = vmatprep.subr.bf16.mxu0 0
    %405 = vmatpush1.bf16.msra.mxu0 0
    %406 = vmatprep.mubr.bf16.mxu0 0
    %407 = vmatmul.mubr.bf16.gmra.mrb[0].mxu0 %v373
    %v408 = vpop.f32.mrb[0].mxu0
    %v409 = vadd.f32 0.0, %v408
    %v410 = vpop.f32.mrb[0].mxu0
    %v411 = vpop.f32.mrb[0].mxu0
    %v412 = vpop.f32.mrb[0].mxu0
    %413 = vdwg.mxu0
    %414 = vmatprep.subr.bf16.mxu0 0
    %415 = vmatpush1.bf16.msra.mxu0 %v362
    %416 = vmatprep.subr.bf16.mxu0 0
    %417 = vmatpush1.bf16.msra.mxu0 %v363
    %418 = vmatprep.subr.bf16.mxu0 0
    %419 = vmatpush1.bf16.msra.mxu0 %v364
    %420 = vmatprep.subr.bf16.mxu0 0
    %421 = vmatpush1.bf16.msra.mxu0 %v365
    %422 = vmatprep.subr.bf16.mxu0 0
    %423 = vmatpush1.bf16.msra.mxu0 %v366
    %424 = vmatprep.subr.bf16.mxu0 0
    %425 = vmatpush1.bf16.msra.mxu0 %v367
    %426 = vmatprep.subr.bf16.mxu0 0
    %427 = vmatpush1.bf16.msra.mxu0 %v368
    %428 = vmatprep.subr.bf16.mxu0 0
    %429 = vmatpush1.bf16.msra.mxu0 %v369
    %430 = vmatprep.subr.bf16.mxu0 0
    %431 = vmatpush1.bf16.msra.mxu0 0
    %432 = vmatprep.subr.bf16.mxu0 0
    %433 = vmatpush1.bf16.msra.mxu0 0
    %434 = vmatprep.subr.bf16.mxu0 0
    %435 = vmatpush1.bf16.msra.mxu0 0
    %436 = vmatprep.subr.bf16.mxu0 0
    %437 = vmatpush1.bf16.msra.mxu0 0
    %438 = vmatprep.subr.bf16.mxu0 0
    %439 = vmatpush1.bf16.msra.mxu0 0
    %440 = vmatprep.subr.bf16.mxu0 0
    %441 = vmatpush1.bf16.msra.mxu0 0
    %442 = vmatprep.subr.bf16.mxu0 0
    %443 = vmatpush1.bf16.msra.mxu0 0
    %444 = vmatprep.subr.bf16.mxu0 0
    %445 = vmatpush1.bf16.msra.mxu0 0
    %446 = vmatprep.mubr.bf16.mxu0 0
    %447 = vmatmul.mubr.bf16.gmra.mrb[0].mxu0 %v370
    %v448 = vpop.f32.mrb[0].mxu0
    %v449 = vadd.f32 %v409, %v448
    %v450 = vpop.f32.mrb[0].mxu0
    %v451 = vpop.f32.mrb[0].mxu0
    %v452 = vpop.f32.mrb[0].mxu0
    %453 = vdwg.mxu0
    %v454 = vlog2.pop %v449
    %v455 = vmul.f32 %v454, 0.6931472
    %v456 = vsub.f32 %v455, %v310
    %v457 = vmul.f32 %v300, %v456
    %v458 = vsel %vm306, %v457, 0.0
    %v459 = vrot.slane %v458, 4
    %v460 = vadd.f32 %v458, %v459
    %v461 = vrot.slane %v460, 2
    %v462 = vadd.f32 %v460, %v461
    %v463 = vrot.slane %v462, 1
    %v464 = vadd.f32 %v462, %v463
    %465 = vst [vmem:[#allocation7] sm:$0xff] %v464
    // Predicated region
    $region18: #{tpu_custom_call.1} parent=1 // pred_check
      _
    $region19: #{tpu_custom_call.1} parent=1 // pred_check_branch
      %467 = sbr.rel (0) target = $region21
    $region20: #{tpu_custom_call.1} parent=1 // pred_region
      %s469 = ssub.s32 128, 128
      %470 = vsyncadd [#allocation4], %s469
      %s472 = sshll.u32 [#allocation7], 4
      %s473 = int_to_ptr.vmem [resolvable:$true] %s472
      %475 = dma.vmem_to_hbm [thread:$0]  %s473, 128, %s2, [#allocation4]
    $region21: #{tpu_custom_call.1} parent=1 // pred_fallthru
      _
    // Predicated region
    $region22: #{tpu_custom_call.1} parent=1 // pred_check
      _
    $region23: #{tpu_custom_call.1} parent=1 // pred_check_branch
      %477 = sbr.rel (0) target = $region25
    $region24: #{tpu_custom_call.1} parent=1 // pred_region
      %478 = dma.done [#allocation4], 128
    $region25: #{tpu_custom_call.1} parent=1 // pred_fallthru
      _
    %479 = vsyncpa [#allocation3], 1
    %480 = vsyncpa [#allocation6], 1
    %481 = vsyncpa [#allocation4], 1

</llo_original>
